<compile_context>
chip_gen: v5e
topology: v5e:2x2
jax: 0.10.0
libtpu: 0.0.40
codegen_flags: <defaults>
</compile_context>

<pallas_src>
import functools

import jax
import jax.numpy as jnp
from jax.experimental import pallas as pl
from jax.experimental.pallas import tpu as pltpu


def _ctx_scatter_kernel(n_cls, n_ctx, block_classes,
                        ctx_ref, template_ref, out_ref, ctx_vmem, sem):
    """Write the broadcast ctx into rows [1, 1+n_ctx) of block_classes classes."""
    del template_ref  # Aliased with out_ref: prefix/suffix rows already in place.
    i = pl.program_id(0)

    # Broadcast the shared (n_ctx, D) context over the class-batch axis in VMEM.
    # (Recomputed every step so it is correct even if the parallel class axis is
    # sharded across TensorCores; the cost is tiny VPU/store work.)
    ctx_vmem[...] = jnp.broadcast_to(
        ctx_ref[...].astype(ctx_vmem.dtype)[None], ctx_vmem.shape
    )

    # Start of this class batch.  The last (possibly partial) batch is clamped
    # so the DMA stays in bounds; overlapping classes are simply rewritten with
    # identical data, which is harmless.
    c0 = jnp.minimum(i * block_classes, n_cls - block_classes)

    copy = pltpu.make_async_copy(
        ctx_vmem,
        out_ref.at[pl.ds(c0, block_classes), pl.ds(1, n_ctx), :],
        sem,
    )
    copy.start()
    copy.wait()


def prompt_learner_forward(ctx, prompt_template, *, block_classes=128):
    """PromptLearner.forward() ('end' position, generic context) on TPU.

    Args:
      ctx:             (n_ctx, ctx_dim) learnable context (shared by all classes).
      prompt_template: (n_cls, seq, ctx_dim) embedded tokenized prompts; rows
                       [:1] are token_prefix and rows [1+n_ctx:] are
                       token_suffix (exactly how the PyTorch module builds its
                       buffers).  The rows [1, 1+n_ctx) (placeholder 'X' tokens)
                       are overwritten by ctx.
      block_classes:   classes assembled per grid step (DMA batch size).

    Returns:
      prompts: (n_cls, seq, ctx_dim) == concat([prefix, broadcast(ctx), suffix], axis=1)
    """
    n_cls, seq, ctx_dim = prompt_template.shape
    n_ctx = ctx.shape[0]
    assert 1 + n_ctx <= seq, "seq must hold SOS + ctx + suffix"
    bc = min(block_classes, n_cls)
    grid = (pl.cdiv(n_cls, bc),)

    kernel = functools.partial(_ctx_scatter_kernel, n_cls, n_ctx, bc)

    return pl.pallas_call(
        kernel,
        out_shape=jax.ShapeDtypeStruct((n_cls, seq, ctx_dim), prompt_template.dtype),
        grid=grid,
        in_specs=[
            # Shared ctx block: same block every step -> fetched into VMEM once.
            pl.BlockSpec((n_ctx, ctx_dim), lambda i: (0, 0)),
            # Template stays in HBM; it is the (aliased) output buffer.
            pl.BlockSpec(memory_space=pl.ANY),
        ],
        out_specs=pl.BlockSpec(memory_space=pl.ANY),  # written in place via DMA
        scratch_shapes=[
            pltpu.VMEM((bc, n_ctx, ctx_dim), prompt_template.dtype),
            pltpu.SemaphoreType.DMA(()),
        ],
        input_output_aliases={1: 0},  # prompts buffer == template buffer
        compiler_params=pltpu.CompilerParams(
            dimension_semantics=("parallel",),
        ),
    )(ctx, prompt_template)


if __name__ == "__main__":
    # Small, deterministic synthetic setup consistent with the module __init__:
    # n_cls classnames, n_ctx generic context tokens (std=0.02 normal init), and
    # the embedded tokenized prompts drawn directly (no checkpoint).
    n_cls = 8      # number of classnames
    n_ctx = 4      # cfg.NCTX
    ctx_dim = 128  # clip_model.ln_final.weight.shape[0]
    seq = 16       # tokenized prompt length (CLIP uses 77; small here)

    key = jax.random.PRNGKey(0)
    k_ctx, k_emb = jax.random.split(key)

    # nn.init.normal_(ctx_vectors, std=0.02) -- generic (non-CSC) context
    ctx = 0.02 * jax.random.normal(k_ctx, (n_ctx, ctx_dim), dtype=jnp.float32)

    # Embedding of the tokenized prompts: (n_cls, seq, ctx_dim).
    embedding = jax.random.normal(k_emb, (n_cls, seq, ctx_dim), dtype=jnp.float32)

    fwd = jax.jit(prompt_learner_forward, static_argnames=("block_classes",))

    # Default batching (single grid step for this tiny demo).
    prompts = fwd(ctx, embedding)
    jax.block_until_ready(prompts)

    # Also exercise the multi-step / clamped-tail path (block_classes=3 over 8
    # classes -> grid of 3 with an overlapping last batch).
    prompts_tail = fwd(ctx, embedding, block_classes=3)
    jax.block_until_ready(prompts_tail)

    # Pure-JAX reference of the 'end' branch of forward().
    token_prefix = embedding[:, :1, :]
    token_suffix = embedding[:, 1 + n_ctx:, :]
    ctx_expanded = jnp.broadcast_to(ctx[None], (n_cls, n_ctx, ctx_dim))
    prompts_ref = jnp.concatenate([token_prefix, ctx_expanded, token_suffix], axis=1)

    assert prompts.shape == (n_cls, seq, ctx_dim), prompts.shape
    assert jnp.allclose(prompts, prompts_ref), "mismatch vs reference (default B)"
    assert jnp.allclose(prompts_tail, prompts_ref), "mismatch vs reference (B=3)"

    print("KERNEL_OK")
</pallas_src>

<mosaic_0001>
module attributes {stable_mosaic.version = 11 : i64} {
  func.func @_ctx_scatter_kernel(%arg0: i32, %arg1: memref<4x128xf32, #tpu.memory_space<vmem>>, %arg2: memref<8x16x128xf32, #tpu.memory_space<any>>, %arg3: memref<8x16x128xf32, #tpu.memory_space<any>>, %arg4: memref<8x4x128xf32, #tpu.memory_space<vmem>>, %arg5: memref<!tpu.dma_semaphore, #tpu.memory_space<semaphore_mem>>) attributes {dimension_semantics = [#tpu.dimension_semantics<parallel>], iteration_bounds = array<i64: 1>, scalar_prefetch = 0 : i64, scratch_operands = 2 : i64, tpu.core_type = #tpu.core_type<tc>, window_params = [{pipeline_mode = #tpu.pipeline_mode<synchronous>, transform_indices = @transform_0, window_bounds = array<i64: 4, 128>}, {}, {}]} {
    %c0 = arith.constant 0 : index
    %c0_0 = arith.constant 0 : index
    %0 = vector.load %arg1[%c0, %c0_0] : memref<4x128xf32, #tpu.memory_space<vmem>>, vector<4x128xf32>
    %1 = vector.shape_cast %0 : vector<4x128xf32> to vector<1x4x128xf32>
    %2 = vector.shape_cast %1 : vector<1x4x128xf32> to vector<1x4x128xf32>
    %3 = vector.broadcast %2 : vector<1x4x128xf32> to vector<8x4x128xf32>
    %c0_1 = arith.constant 0 : index
    %c0_2 = arith.constant 0 : index
    %c0_3 = arith.constant 0 : index
    %4 = vector.load %arg4[%c0_1, %c0_2, %c0_3] : memref<8x4x128xf32, #tpu.memory_space<vmem>>, vector<8x4x128xf32>
    tpu.vector_store %arg4[%c0_1, %c0_2, %c0_3], %3 {strides = array<i32>} : memref<8x4x128xf32, #tpu.memory_space<vmem>>, vector<8x4x128xf32>,
    %c8_i32 = arith.constant 8 : i32
    %5 = arith.muli %arg0, %c8_i32 : i32
    %c0_i32 = arith.constant 0 : i32
    %6 = arith.minsi %5, %c0_i32 : i32
    %c1_i32 = arith.constant 1 : i32
    %c0_i32_4 = arith.constant 0 : i32
    %7 = tpu.memref_slice %arg3[%6, %c1_i32, %c0_i32_4] : memref<8x16x128xf32, #tpu.memory_space<any>> -> memref<8x4x128xf32, #tpu.memory_space<any>>
    tpu.enqueue_dma source(%arg4 : memref<8x4x128xf32, #tpu.memory_space<vmem>>) target(%7 : memref<8x4x128xf32, #tpu.memory_space<any>>) target_semaphore(%arg5 : memref<!tpu.dma_semaphore, #tpu.memory_space<semaphore_mem>>)
    %c1_i32_5 = arith.constant 1 : i32
    %c0_i32_6 = arith.constant 0 : i32
    %8 = tpu.memref_slice %arg3[%6, %c1_i32_5, %c0_i32_6] : memref<8x16x128xf32, #tpu.memory_space<any>> -> memref<8x4x128xf32, #tpu.memory_space<any>>
    tpu.wait_dma2 semaphore(%arg5 : memref<!tpu.dma_semaphore, #tpu.memory_space<semaphore_mem>>) src(%arg4 : memref<8x4x128xf32, #tpu.memory_space<vmem>>) dst(%8 : memref<8x4x128xf32, #tpu.memory_space<any>>)
    return
  }
  func.func @transform_0(%arg0: i32) -> (i32, i32) {
    %c0_i32 = arith.constant 0 : i32
    %c0_i32_0 = arith.constant 0 : i32
    %c0_i32_1 = arith.constant 0 : i32
    return %c0_i32, %c0_i32_0 : i32, i32
  }
}

</mosaic_0001>

<llo_original>
// kernel: prompt_learner_forward.1
$region0: #{prompt_learner_forward.1}
  #allocation0 [shape = 'u32[]', space=smem, size = 0x4, offset = 0x4, fixed_abs, tag = 'smem constant byte address 0x4 - core index']
  #allocation1 [shape = 'u32[72,128]{1,0:T(1,128)}', space=vmem, size = 0x9000, scoped, tag = 'internal scratch']
  #allocation2 [shape = 'f32[8,4,128]{2,1,0:T(4,128)}', space=vmem, size = 0x4000, scoped, tag = 'scratch operand']
  #allocation3 [shape = 's32[1]{0}', space=sflag, size = 0x4, scoped, tag = 'scratch operand']
  #allocation4 [shape = 's32[]', space=sflag, size = 0x4, offset = 0, fixed_abs, tag = 'sflag constant byte address 0x0 - dummy sync flag']
  %s0 = inlined_call_operand.vmem [shape: f32[4,128], index: 0, kind: input, shape index: {}]
  %s1 = inlined_call_operand.hbm [shape: f32[8,16,128], index: 1, kind: input, shape index: {}, may-alias: {1,2}]
  %s2 = inlined_call_operand.hbm [shape: f32[8,16,128], index: 2, kind: output, shape index: {}, may-alias: {1,2}]
  %s3 = sld [smem:[#allocation0]]
  $region6: #{prompt_learner_forward.1} parent=0
    _
  %s5 = ssub.s32 1, %s3
  %s6 = scalar_select 0, %s5, %s3
  // Predicated region
  $region2: #{prompt_learner_forward.1} parent=0 // pred_check
    _
  $region3: #{prompt_learner_forward.1} parent=0 // pred_check_branch
    %8 = sbr.rel (0) target = $region5
  $region4: #{prompt_learner_forward.1} parent=0 // pred_region
    _
  $region5: #{prompt_learner_forward.1} parent=0 // pred_fallthru
    _
  %v9 = vld [vmem:[%s0] sm:$0xf]
  %10 = vst [vmem:[#allocation2] sm:$0xf] %v9
  %11 = vst [vmem:[#allocation2 + $0x4] sm:$0xf] %v9
  %12 = vst [vmem:[#allocation2 + $0x8] sm:$0xf] %v9
  %13 = vst [vmem:[#allocation2 + $0xc] sm:$0xf] %v9
  %14 = vst [vmem:[#allocation2 + $0x10] sm:$0xf] %v9
  %15 = vst [vmem:[#allocation2 + $0x14] sm:$0xf] %v9
  %16 = vst [vmem:[#allocation2 + $0x18] sm:$0xf] %v9
  %17 = vst [vmem:[#allocation2 + $0x1c] sm:$0xf] %v9
  %s18 = smul.u32 0, 8
  %p19 = scmp.lt.s32.totalorder %s18, 0
  %s20 = scalar_select %p19, %s18, 0
  %s21 = smul.u32 %s20, 16
  %s22 = sadd.s32 1, %s21
  %s23 = scalar_lea.hbm %s2, %s22
  %s24 = sshll.u32 [#allocation2], 4
  %s25 = int_to_ptr.vmem [resolvable:$true] %s24
  %s26 = sshll.u32 %s23, 4
  %s27 = int_to_ptr.hbm [resolvable:$true] %s26
  %31 = dma.vmem_to_hbm [thread:$0]  %s25, 512, %s27, [#allocation3], 64, 256, 4
  %s32 = smul.u32 8, 4
  %s33 = smul.u32 %s32, 1
  %s34 = sshll.u32 %s33, 4
  %35 = dma.done [#allocation3], %s34
  %36 = vsyncmov [#allocation3]
  %s37 = vpop.sfrf %36
  %p38 = scmp.eq.s32.totalorder %s37, 0
  %p39 = pneg %p38
  %41 = shalt.err (%p39)

</llo_original>
